<compile_context>
chip_gen: v5e
topology: v5e:2x2
jax: 0.10.0
libtpu: 0.0.40
codegen_flags: <defaults>
</compile_context>

<pallas_src>
import jax
import jax.numpy as jnp
from jax.experimental import pallas as pl
from jax.experimental.pallas import tpu as pltpu

LANE = 128          # TPU lane width
NEG_BIG = -1e30     # bias for padded action lanes -> exp() underflows to exactly 0


def _round_up(n, m):
    return ((n + m - 1) // m) * m


def policy_net_kernel(x_ref, w1_ref, b1_ref, w2_ref, b2_ref, w3_ref, b3_ref,
                      out_ref):
    # Deliberate f32 -> bf16 cast: feed the bf16-native MXU, accumulate in f32.
    x = x_ref[...].astype(jnp.bfloat16)

    # Layer 1: Linear (bf16 x bf16 -> f32) + bias/ReLU in f32.
    h1 = jnp.dot(x, w1_ref[...], preferred_element_type=jnp.float32) + b1_ref[...]
    h1 = jnp.maximum(h1, 0.0).astype(jnp.bfloat16)

    # Layer 2: Linear + ReLU.
    h2 = jnp.dot(h1, w2_ref[...], preferred_element_type=jnp.float32) + b2_ref[...]
    h2 = jnp.maximum(h2, 0.0).astype(jnp.bfloat16)

    # Layer 3: Linear (output lane-padded to a multiple of 128; padded lanes
    # carry a -1e30 bias so they contribute exactly 0 after softmax).
    logits = jnp.dot(h2, w3_ref[...], preferred_element_type=jnp.float32) + b3_ref[...]

    # Numerically stable softmax over the last axis, f32.
    m = jnp.max(logits, axis=-1, keepdims=True)
    e = jnp.exp(logits - m)
    denom = jnp.sum(e, axis=-1, keepdims=True)
    # approx=True would move this fully onto the EUP fast path but needs a
    # looser sum-to-1 tolerance; approx=False keeps 1e-5 accuracy.
    inv = pl.reciprocal(denom, approx=False)
    out_ref[...] = (e * inv).astype(out_ref.dtype)


def prepare_params(params_f32, action_num):
    """Cast weights to bf16 (MXU-native on v6e/v7x), keep biases in f32, and
    lane-pad the last layer to a multiple of 128 for lane-dense output stores.
    Padded output columns get zero weights and a -1e30 bias so their softmax
    probability is exactly 0 and does not perturb the real probabilities."""
    a_pad = _round_up(action_num, LANE)
    pad = a_pad - action_num
    w3 = jnp.pad(params_f32["w3"].astype(jnp.float32), ((0, 0), (0, pad)))
    b3 = jnp.pad(params_f32["b3"].astype(jnp.float32), ((0, 0), (0, pad)),
                 constant_values=NEG_BIG)
    return {
        "w1": params_f32["w1"].astype(jnp.bfloat16),
        "b1": params_f32["b1"].astype(jnp.float32),
        "w2": params_f32["w2"].astype(jnp.bfloat16),
        "b2": params_f32["b2"].astype(jnp.float32),
        "w3": w3.astype(jnp.bfloat16),
        "b3": b3,
        "action_num": action_num,
    }


def policy_net_forward(x, prepared, *, tile_b_max=256):
    """x: [B, state_dim] float32; prepared: output of prepare_params."""
    w1, b1, w2, b2, w3, b3 = (prepared["w1"], prepared["b1"], prepared["w2"],
                              prepared["b2"], prepared["w3"], prepared["b3"])
    action_num = prepared["action_num"]
    B, state_dim = x.shape
    hidden_dim = w1.shape[1]
    a_pad = w3.shape[1]

    # Batch tile: multiple of 8 (f32 sublane), capped so large rollout batches
    # get several grid steps (pipelining + v7x megacore sharding).
    tile_b = min(tile_b_max, _round_up(max(B, 1), 8))
    b_pad = _round_up(B, tile_b)
    if b_pad != B:
        x = jnp.pad(x, ((0, b_pad - B), (0, 0)))

    grid = (b_pad // tile_b,)

    out = pl.pallas_call(
        policy_net_kernel,
        out_shape=jax.ShapeDtypeStruct((b_pad, a_pad), jnp.float32),
        grid_spec=pltpu.PrefetchScalarGridSpec(
            num_scalar_prefetch=0,
            grid=grid,
            in_specs=[
                pl.BlockSpec((tile_b, state_dim), lambda i: (i, 0)),
                pl.BlockSpec((state_dim, hidden_dim), lambda i: (0, 0)),
                pl.BlockSpec((1, hidden_dim), lambda i: (0, 0)),
                pl.BlockSpec((hidden_dim, hidden_dim), lambda i: (0, 0)),
                pl.BlockSpec((1, hidden_dim), lambda i: (0, 0)),
                pl.BlockSpec((hidden_dim, a_pad), lambda i: (0, 0)),
                pl.BlockSpec((1, a_pad), lambda i: (0, 0)),
            ],
            out_specs=pl.BlockSpec((tile_b, a_pad), lambda i: (i, 0)),
        ),
        compiler_params=pltpu.CompilerParams(
            dimension_semantics=("parallel",)),
    )(x, w1, b1, w2, b2, w3, b3)

    # Drop batch padding and the lane padding on the action dimension.
    return out[:B, :action_num]


def init_params(key, state_dim, hidden_dim, action_num):
    """Deterministic init mimicking torch.nn.Linear default (uniform +/- 1/sqrt(fan_in)).
    Weights are stored as [in, out] (transposed vs. torch's [out, in])."""
    def linear(key, fan_in, fan_out):
        kw, kb = jax.random.split(key)
        bound = 1.0 / (fan_in ** 0.5)
        w = jax.random.uniform(kw, (fan_in, fan_out), jnp.float32, -bound, bound)
        b = jax.random.uniform(kb, (1, fan_out), jnp.float32, -bound, bound)
        return w, b

    k1, k2, k3 = jax.random.split(key, 3)
    w1, b1 = linear(k1, state_dim, hidden_dim)
    w2, b2 = linear(k2, hidden_dim, hidden_dim)
    w3, b3 = linear(k3, hidden_dim, action_num)
    return {"w1": w1, "b1": b1, "w2": w2, "b2": b2, "w3": w3, "b3": b3}


def reference_forward(x, p):
    h1 = jnp.maximum(x @ p["w1"] + p["b1"], 0.0)
    h2 = jnp.maximum(h1 @ p["w2"] + p["b2"], 0.0)
    logits = h2 @ p["w3"] + p["b3"]
    return jax.nn.softmax(logits, axis=-1)


if __name__ == "__main__":
    key = jax.random.PRNGKey(0)
    kx, kp, kx2 = jax.random.split(key, 3)

    batch = 2
    state_dim = 8
    hidden_dim = 32
    action_num = 4

    params = init_params(kp, state_dim, hidden_dim, action_num)
    prepared = prepare_params(params, action_num)

    # Small demo batch (typical single/few-state policy query).
    x = jax.random.normal(kx, (batch, state_dim), jnp.float32)
    out = jax.block_until_ready(policy_net_forward(x, prepared))
    ref = reference_forward(x, params)
    assert out.shape == (batch, action_num)
    # bf16 matmuls vs f32 reference -> loosened elementwise tolerance.
    assert jnp.allclose(out, ref, atol=2e-2, rtol=2e-2), \
        float(jnp.max(jnp.abs(out - ref)))
    assert jnp.allclose(jnp.sum(out, axis=-1), 1.0, atol=1e-5)

    # Larger batch exercises the multi-step batch grid + padding path.
    big_batch = 300
    x2 = jax.random.normal(kx2, (big_batch, state_dim), jnp.float32)
    out2 = jax.block_until_ready(policy_net_forward(x2, prepared))
    ref2 = reference_forward(x2, params)
    assert out2.shape == (big_batch, action_num)
    assert jnp.allclose(out2, ref2, atol=2e-2, rtol=2e-2), \
        float(jnp.max(jnp.abs(out2 - ref2)))
    assert jnp.allclose(jnp.sum(out2, axis=-1), 1.0, atol=1e-5)

    print("KERNEL_OK")
</pallas_src>

<mosaic_0001>
module attributes {stable_mosaic.version = 11 : i64} {
  func.func @policy_net_kernel(%arg0: i32, %arg1: memref<8x8xf32, #tpu.memory_space<vmem>>, %arg2: memref<8x32xbf16, #tpu.memory_space<vmem>>, %arg3: memref<1x32xf32, #tpu.memory_space<vmem>>, %arg4: memref<32x32xbf16, #tpu.memory_space<vmem>>, %arg5: memref<1x32xf32, #tpu.memory_space<vmem>>, %arg6: memref<32x128xbf16, #tpu.memory_space<vmem>>, %arg7: memref<1x128xf32, #tpu.memory_space<vmem>>, %arg8: memref<8x128xf32, #tpu.memory_space<vmem>>) attributes {dimension_semantics = [#tpu.dimension_semantics<parallel>], iteration_bounds = array<i64: 1>, scalar_prefetch = 0 : i64, scratch_operands = 0 : i64, tpu.core_type = #tpu.core_type<tc>, window_params = [{transform_indices = @transform_0, window_bounds = array<i64: 8, 8>}, {pipeline_mode = #tpu.pipeline_mode<synchronous>, transform_indices = @transform_1, window_bounds = array<i64: 8, 32>}, {pipeline_mode = #tpu.pipeline_mode<synchronous>, transform_indices = @transform_2, window_bounds = array<i64: 1, 32>}, {pipeline_mode = #tpu.pipeline_mode<synchronous>, transform_indices = @transform_3, window_bounds = array<i64: 32, 32>}, {pipeline_mode = #tpu.pipeline_mode<synchronous>, transform_indices = @transform_4, window_bounds = array<i64: 1, 32>}, {pipeline_mode = #tpu.pipeline_mode<synchronous>, transform_indices = @transform_5, window_bounds = array<i64: 32, 128>}, {pipeline_mode = #tpu.pipeline_mode<synchronous>, transform_indices = @transform_6, window_bounds = array<i64: 1, 128>}, {transform_indices = @transform_7, window_bounds = array<i64: 8, 128>}]} {
    %c0 = arith.constant 0 : index
    %c0_0 = arith.constant 0 : index
    %0 = vector.load %arg1[%c0, %c0_0] : memref<8x8xf32, #tpu.memory_space<vmem>>, vector<8x8xf32>
    %1 = arith.truncf %0 : vector<8x8xf32> to vector<8x8xbf16>
    %c0_1 = arith.constant 0 : index
    %c0_2 = arith.constant 0 : index
    %2 = vector.load %arg2[%c0_1, %c0_2] : memref<8x32xbf16, #tpu.memory_space<vmem>>, vector<8x32xbf16>
    %cst = arith.constant dense<0.000000e+00> : vector<8x32xf32>
    %3 = tpu.matmul %1, %2, %cst {dimension_numbers = #tpu.dot_dimension_numbers<[1], [0], [0], [1], [0, 0, 1, 1], [], []>} : vector<8x8xbf16>, vector<8x32xbf16>, vector<8x32xf32> -> vector<8x32xf32>
    %c0_3 = arith.constant 0 : index
    %c0_4 = arith.constant 0 : index
    %4 = vector.load %arg3[%c0_3, %c0_4] : memref<1x32xf32, #tpu.memory_space<vmem>>, vector<1x32xf32>
    %5 = vector.broadcast %4 : vector<1x32xf32> to vector<8x32xf32>
    %6 = arith.addf %3, %5 : vector<8x32xf32>
    %cst_5 = arith.constant 0.000000e+00 : f32
    %7 = vector.broadcast %cst_5 : f32 to vector<8x32xf32>
    %8 = arith.maximumf %6, %7 : vector<8x32xf32>
    %9 = arith.truncf %8 : vector<8x32xf32> to vector<8x32xbf16>
    %c0_6 = arith.constant 0 : index
    %c0_7 = arith.constant 0 : index
    %10 = vector.load %arg4[%c0_6, %c0_7] : memref<32x32xbf16, #tpu.memory_space<vmem>>, vector<32x32xbf16>
    %cst_8 = arith.constant dense<0.000000e+00> : vector<8x32xf32>
    %11 = tpu.matmul %9, %10, %cst_8 {dimension_numbers = #tpu.dot_dimension_numbers<[1], [0], [0], [1], [0, 0, 1, 1], [], []>} : vector<8x32xbf16>, vector<32x32xbf16>, vector<8x32xf32> -> vector<8x32xf32>
    %c0_9 = arith.constant 0 : index
    %c0_10 = arith.constant 0 : index
    %12 = vector.load %arg5[%c0_9, %c0_10] : memref<1x32xf32, #tpu.memory_space<vmem>>, vector<1x32xf32>
    %13 = vector.broadcast %12 : vector<1x32xf32> to vector<8x32xf32>
    %14 = arith.addf %11, %13 : vector<8x32xf32>
    %cst_11 = arith.constant 0.000000e+00 : f32
    %15 = vector.broadcast %cst_11 : f32 to vector<8x32xf32>
    %16 = arith.maximumf %14, %15 : vector<8x32xf32>
    %17 = arith.truncf %16 : vector<8x32xf32> to vector<8x32xbf16>
    %c0_12 = arith.constant 0 : index
    %c0_13 = arith.constant 0 : index
    %18 = vector.load %arg6[%c0_12, %c0_13] : memref<32x128xbf16, #tpu.memory_space<vmem>>, vector<32x128xbf16>
    %cst_14 = arith.constant dense<0.000000e+00> : vector<8x128xf32>
    %19 = tpu.matmul %17, %18, %cst_14 {dimension_numbers = #tpu.dot_dimension_numbers<[1], [0], [0], [1], [0, 0, 1, 1], [], []>} : vector<8x32xbf16>, vector<32x128xbf16>, vector<8x128xf32> -> vector<8x128xf32>
    %c0_15 = arith.constant 0 : index
    %c0_16 = arith.constant 0 : index
    %20 = vector.load %arg7[%c0_15, %c0_16] : memref<1x128xf32, #tpu.memory_space<vmem>>, vector<1x128xf32>
    %21 = vector.broadcast %20 : vector<1x128xf32> to vector<8x128xf32>
    %22 = arith.addf %19, %21 : vector<8x128xf32>
    %cst_17 = arith.constant dense<0xFF800000> : vector<8xf32>
    %23 = vector.multi_reduction <maximumf>, %22, %cst_17 [1] : vector<8x128xf32> to vector<8xf32>
    %24 = vector.shape_cast %23 : vector<8xf32> to vector<8x1xf32>
    %25 = vector.broadcast %24 : vector<8x1xf32> to vector<8x128xf32>
    %26 = arith.subf %22, %25 : vector<8x128xf32>
    %27 = math.exp %26 : vector<8x128xf32>
    %cst_18 = arith.constant dense<0.000000e+00> : vector<8xf32>
    %28 = vector.multi_reduction <add>, %27, %cst_18 [1] : vector<8x128xf32> to vector<8xf32>
    %29 = vector.shape_cast %28 : vector<8xf32> to vector<8x1xf32>
    %30 = tpu.reciprocal %29 : vector<8x1xf32> -> vector<8x1xf32>
    %31 = vector.broadcast %30 : vector<8x1xf32> to vector<8x128xf32>
    %32 = arith.mulf %27, %31 : vector<8x128xf32>
    %c0_19 = arith.constant 0 : index
    %c0_20 = arith.constant 0 : index
    %33 = vector.load %arg8[%c0_19, %c0_20] : memref<8x128xf32, #tpu.memory_space<vmem>>, vector<8x128xf32>
    tpu.vector_store %arg8[%c0_19, %c0_20], %32 {strides = array<i32>} : memref<8x128xf32, #tpu.memory_space<vmem>>, vector<8x128xf32>,
    return
  }
  func.func @transform_0(%arg0: i32) -> (i32, i32) {
    %c0_i32 = arith.constant 0 : i32
    %c0_i32_0 = arith.constant 0 : i32
    return %arg0, %c0_i32 : i32, i32
  }
  func.func @transform_1(%arg0: i32) -> (i32, i32) {
    %c0_i32 = arith.constant 0 : i32
    %c0_i32_0 = arith.constant 0 : i32
    %c0_i32_1 = arith.constant 0 : i32
    return %c0_i32, %c0_i32_0 : i32, i32
  }
  func.func @transform_2(%arg0: i32) -> (i32, i32) {
    %c0_i32 = arith.constant 0 : i32
    %c0_i32_0 = arith.constant 0 : i32
    %c0_i32_1 = arith.constant 0 : i32
    return %c0_i32, %c0_i32_0 : i32, i32
  }
  func.func @transform_3(%arg0: i32) -> (i32, i32) {
    %c0_i32 = arith.constant 0 : i32
    %c0_i32_0 = arith.constant 0 : i32
    %c0_i32_1 = arith.constant 0 : i32
    return %c0_i32, %c0_i32_0 : i32, i32
  }
  func.func @transform_4(%arg0: i32) -> (i32, i32) {
    %c0_i32 = arith.constant 0 : i32
    %c0_i32_0 = arith.constant 0 : i32
    %c0_i32_1 = arith.constant 0 : i32
    return %c0_i32, %c0_i32_0 : i32, i32
  }
  func.func @transform_5(%arg0: i32) -> (i32, i32) {
    %c0_i32 = arith.constant 0 : i32
    %c0_i32_0 = arith.constant 0 : i32
    %c0_i32_1 = arith.constant 0 : i32
    return %c0_i32, %c0_i32_0 : i32, i32
  }
  func.func @transform_6(%arg0: i32) -> (i32, i32) {
    %c0_i32 = arith.constant 0 : i32
    %c0_i32_0 = arith.constant 0 : i32
    %c0_i32_1 = arith.constant 0 : i32
    return %c0_i32, %c0_i32_0 : i32, i32
  }
  func.func @transform_7(%arg0: i32) -> (i32, i32) {
    %c0_i32 = arith.constant 0 : i32
    %c0_i32_0 = arith.constant 0 : i32
    return %arg0, %c0_i32 : i32, i32
  }
}

</mosaic_0001>

<llo_original>
// kernel: tpu_custom_call.1
$region0: #{tpu_custom_call.1}
  #allocation0 [shape = 'u32[]', space=smem, size = 0x4, offset = 0x4, fixed_abs, tag = 'smem constant byte address 0x4 - core index']
  #allocation1 [shape = 'u32[72,128]{1,0:T(1,128)}', space=vmem, size = 0x9000, scoped, tag = 'internal scratch']
  %s0 = inlined_call_operand.hbm [shape: f32[8,8], index: 0, kind: input, shape index: {}]
  %s1 = inlined_call_operand.hbm [shape: bf16[8,32], index: 1, kind: input, shape index: {}]
  %s2 = inlined_call_operand.vmem [shape: f32[1,32], index: 2, kind: input, shape index: {}]
  %s3 = inlined_call_operand.hbm [shape: bf16[32,32], index: 3, kind: input, shape index: {}]
  %s4 = inlined_call_operand.vmem [shape: f32[1,32], index: 4, kind: input, shape index: {}]
  %s5 = inlined_call_operand.hbm [shape: bf16[32,128], index: 5, kind: input, shape index: {}]
  %s6 = inlined_call_operand.vmem [shape: f32[1,128], index: 6, kind: input, shape index: {}]
  %s7 = inlined_call_operand.hbm [shape: f32[8,128], index: 7, kind: output, shape index: {}]
  %s8 = sld [smem:[#allocation0]]
  $region54: #{tpu_custom_call.1} parent=0
    _
  %s10 = ssub.s32 1, %s8
  %s11 = scalar_select 0, %s10, %s8
  $region1: #{tpu_custom_call.1} parent=0
    #allocation2 [shape = 'u8[4096]{0}', space=vmem, size = 0x1000, scoped, tag = 'input window, operand 0, single buffered']
    #allocation3 [shape = 's32[1]{0}', space=sflag, size = 0x4, scoped, tag = 'scoped memory for tpu_custom_call.1']
    #allocation4 [shape = 's32[1]{0}', space=sflag, size = 0x4, scoped, tag = 'scoped memory for tpu_custom_call.1']
    #allocation5 [shape = 'u8[2048]{0}', space=vmem, size = 0x800, scoped, tag = 'input window, operand 1, single buffered']
    #allocation6 [shape = 's32[1]{0}', space=sflag, size = 0x4, scoped, tag = 'scoped memory for tpu_custom_call.1']
    #allocation7 [shape = 'u8[8192]{0}', space=vmem, size = 0x2000, scoped, tag = 'input window, operand 3, single buffered']
    #allocation8 [shape = 'u8[8192]{0}', space=vmem, size = 0x2000, scoped, tag = 'input window, operand 5, single buffered']
    #allocation9 [shape = 's32[1]{0}', space=sflag, size = 0x4, scoped, tag = 'scoped memory for tpu_custom_call.1']
    #allocation10 [shape = 'u8[4096]{0}', space=vmem, size = 0x1000, scoped, tag = 'output window, operand 0, single buffered']
    %12 = vsyncpa [#allocation3], 0
    %13 = vsyncpa [#allocation6], 0
    %14 = vsyncpa [#allocation9], 0
    %15 = vsyncpa [#allocation4], 0
    // Predicated region
    $region2: #{tpu_custom_call.1} parent=1 // pred_check
      _
    $region3: #{tpu_custom_call.1} parent=1 // pred_check_branch
      %17 = sbr.rel (0) target = $region5
    $region4: #{tpu_custom_call.1} parent=1 // pred_region
      %19 = vsyncadd [#allocation3], 0
      %s21 = sshll.u32 %s0, 4
      %s22 = int_to_ptr.hbm [resolvable:$true] %s21
      %s23 = sshll.u32 [#allocation2], 4
      %s24 = int_to_ptr.vmem [resolvable:$true] %s23
      %26 = dma.hbm_to_vmem [thread:$0]  %s22, 128, %s24, [#allocation3]
    $region5: #{tpu_custom_call.1} parent=1 // pred_fallthru
      _
    // Predicated region
    $region6: #{tpu_custom_call.1} parent=1 // pred_check
      _
    $region7: #{tpu_custom_call.1} parent=1 // pred_check_branch
      %28 = sbr.rel (0) target = $region9
    $region8: #{tpu_custom_call.1} parent=1 // pred_region
      %30 = vsyncadd [#allocation6], 0
      %s32 = sshll.u32 %s1, 4
      %s33 = int_to_ptr.hbm [resolvable:$true] %s32
      %s34 = sshll.u32 [#allocation5], 4
      %s35 = int_to_ptr.vmem [resolvable:$true] %s34
      %37 = dma.hbm_to_vmem [thread:$0]  %s33, 64, %s35, [#allocation6]
    $region9: #{tpu_custom_call.1} parent=1 // pred_fallthru
      _
    // Predicated region
    $region10: #{tpu_custom_call.1} parent=1 // pred_check
      _
    $region11: #{tpu_custom_call.1} parent=1 // pred_check_branch
      %39 = sbr.rel (0) target = $region13
    $region12: #{tpu_custom_call.1} parent=1 // pred_region
      _
    $region13: #{tpu_custom_call.1} parent=1 // pred_fallthru
      _
    // Predicated region
    $region14: #{tpu_custom_call.1} parent=1 // pred_check
      _
    $region15: #{tpu_custom_call.1} parent=1 // pred_check_branch
      %41 = sbr.rel (0) target = $region17
    $region16: #{tpu_custom_call.1} parent=1 // pred_region
      %43 = vsyncadd [#allocation6], 0
      %s44 = sshll.u32 %s3, 4
      %s45 = int_to_ptr.hbm [resolvable:$true] %s44
      %s46 = sshll.u32 [#allocation7], 4
      %s47 = int_to_ptr.vmem [resolvable:$true] %s46
      %52 = dma.hbm_to_vmem [thread:$0]  %s45, 256, %s47, [#allocation6], 64, 64, 4
    $region17: #{tpu_custom_call.1} parent=1 // pred_fallthru
      _
    // Predicated region
    $region18: #{tpu_custom_call.1} parent=1 // pred_check
      _
    $region19: #{tpu_custom_call.1} parent=1 // pred_check_branch
      %54 = sbr.rel (0) target = $region21
    $region20: #{tpu_custom_call.1} parent=1 // pred_region
      _
    $region21: #{tpu_custom_call.1} parent=1 // pred_fallthru
      _
    // Predicated region
    $region22: #{tpu_custom_call.1} parent=1 // pred_check
      _
    $region23: #{tpu_custom_call.1} parent=1 // pred_check_branch
      %56 = sbr.rel (0) target = $region25
    $region24: #{tpu_custom_call.1} parent=1 // pred_region
      %58 = vsyncadd [#allocation9], 0
      %s59 = sshll.u32 %s5, 4
      %s60 = int_to_ptr.hbm [resolvable:$true] %s59
      %s61 = sshll.u32 [#allocation8], 4
      %s62 = int_to_ptr.vmem [resolvable:$true] %s61
      %67 = dma.hbm_to_vmem [thread:$0]  %s60, 256, %s62, [#allocation9], 64, 64, 4
    $region25: #{tpu_custom_call.1} parent=1 // pred_fallthru
      _
    // Predicated region
    $region26: #{tpu_custom_call.1} parent=1 // pred_check
      _
    $region27: #{tpu_custom_call.1} parent=1 // pred_check_branch
      %69 = sbr.rel (0) target = $region29
    $region28: #{tpu_custom_call.1} parent=1 // pred_region
      _
    $region29: #{tpu_custom_call.1} parent=1 // pred_fallthru
      _
    // Predicated region
    $region30: #{tpu_custom_call.1} parent=1 // pred_check
      _
    $region31: #{tpu_custom_call.1} parent=1 // pred_check_branch
      %71 = sbr.rel (0) target = $region33
    $region32: #{tpu_custom_call.1} parent=1 // pred_region
      %73 = dma.done [#allocation3], 128
    $region33: #{tpu_custom_call.1} parent=1 // pred_fallthru
      _
    // Predicated region
    $region34: #{tpu_custom_call.1} parent=1 // pred_check
      _
    $region35: #{tpu_custom_call.1} parent=1 // pred_check_branch
      %75 = sbr.rel (0) target = $region37
    $region36: #{tpu_custom_call.1} parent=1 // pred_region
      %77 = dma.done [#allocation6], 64
    $region37: #{tpu_custom_call.1} parent=1 // pred_fallthru
      _
    // Predicated region
    $region38: #{tpu_custom_call.1} parent=1 // pred_check
      _
    $region39: #{tpu_custom_call.1} parent=1 // pred_check_branch
      %79 = sbr.rel (0) target = $region41
    $region40: #{tpu_custom_call.1} parent=1 // pred_region
      %81 = dma.done [#allocation6], 256
    $region41: #{tpu_custom_call.1} parent=1 // pred_fallthru
      _
    // Predicated region
    $region42: #{tpu_custom_call.1} parent=1 // pred_check
      _
    $region43: #{tpu_custom_call.1} parent=1 // pred_check_branch
      %83 = sbr.rel (0) target = $region45
    $region44: #{tpu_custom_call.1} parent=1 // pred_region
      %85 = dma.done [#allocation9], 256
    $region45: #{tpu_custom_call.1} parent=1 // pred_fallthru
      _
    %v87 = vld [vmem:[#allocation2] sm:$0xff]
    %v88 = vpack.c.bf16 %v87, %v87
    %v89 = vld [vmem:[#allocation5] sm:$0xf]
    %v90 = vld [vmem:[%s2] sm:$0x1]
    %v92 = vperm.slane %v90, 0
    %vm94 = vcmask 64512
    %v96 = vsel %vm94, %v88, 0
    %vm98 = vcmask 1043456
    %v100 = vsel %vm98, %v89, 0
    %102 = vmatpush.bf16.msra.mxu0 0
    %103 = vmatpush.bf16.msra.mxu0 0
    %104 = vmatpush.bf16.msra.mxu0 0
    %105 = vmatpush.bf16.msra.mxu0 0
    %106 = vmatpush.bf16.msra.mxu0 0
    %107 = vmatpush.bf16.msra.mxu0 0
    %108 = vmatpush.bf16.msra.mxu0 0
    %109 = vmatpush.bf16.msra.mxu0 %v100
    %110 = vmatmul.bf16.gmra.mxu0 %v96
    %v111 = vpop.f32.mrf.mxu0
    %v112 = vadd.f32 %v92, %v111
    %v113 = vpop.f32.mrf.mxu0
    %114 = vdwg.mxu0
    %v115 = vmax.f32 %v112, 0.0
    %v116 = vpack.c.bf16 %v115, %v115
    %v117 = vld [vmem:[#allocation7] sm:$0xf]
    %v118 = vld [vmem:[#allocation7 + $0x4] sm:$0xf]
    %v119 = vld [vmem:[#allocation7 + $0x8] sm:$0xf]
    %v120 = vld [vmem:[#allocation7 + $0xc] sm:$0xf]
    %v121 = vld [vmem:[%s4] sm:$0x1]
    %v123 = vperm.slane %v121, 0
    %v129 = vunpack.c.l.b16 %v117
    %v130 = vunpack.c.l.b16 %v118
    %v131 = vunpack.c.l.b16 %v119
    %v132 = vunpack.c.l.b16 %v120
    %v133 = vpack.c.b16 %v130, %v129
    %v134 = vpack.c.b16 %v132, %v131
    %vm137 = vcmask 261120
    %v139 = vsel %vm137, %v116, 0
    %141 = vmatpush.bf16.msra.mxu0 0
    %142 = vmatpush.bf16.msra.mxu0 0
    %143 = vmatpush.bf16.msra.mxu0 0
    %144 = vmatpush.bf16.msra.mxu0 0
    %145 = vmatpush.bf16.msra.mxu0 0
    %146 = vmatpush.bf16.msra.mxu0 0
    %147 = vmatpush.bf16.msra.mxu0 %v134
    %148 = vmatpush.bf16.msra.mxu0 %v133
    %149 = vmatmul.bf16.gmra.mxu0 %v139
    %v150 = vpop.f32.mrf.mxu0
    %v151 = vadd.f32 %v123, %v150
    %v152 = vpop.f32.mrf.mxu0
    %153 = vdwg.mxu0
    %v154 = vmax.f32 %v151, 0.0
    %v155 = vpack.c.bf16 %v154, %v154
    %v156 = vld [vmem:[#allocation8] sm:$0xf]
    %v157 = vld [vmem:[#allocation8 + $0x4] sm:$0xf]
    %v158 = vld [vmem:[#allocation8 + $0x8] sm:$0xf]
    %v159 = vld [vmem:[#allocation8 + $0xc] sm:$0xf]
    %v160 = vld [vmem:[%s6] sm:$0x1]
    %v162 = vperm.slane %v160, 0
    %v168 = vunpack.c.l.b16 %v156
    %v169 = vunpack.c.l.b16 %v157
    %v170 = vunpack.c.l.b16 %v158
    %v171 = vunpack.c.l.b16 %v159
    %v172 = vpack.c.b16 %v169, %v168
    %v173 = vpack.c.b16 %v171, %v170
    %v177 = vsel %vm137, %v155, 0
    %179 = vmatpush.bf16.msra.mxu0 0
    %180 = vmatpush.bf16.msra.mxu0 0
    %181 = vmatpush.bf16.msra.mxu0 0
    %182 = vmatpush.bf16.msra.mxu0 0
    %183 = vmatpush.bf16.msra.mxu0 0
    %184 = vmatpush.bf16.msra.mxu0 0
    %185 = vmatpush.bf16.msra.mxu0 %v173
    %186 = vmatpush.bf16.msra.mxu0 %v172
    %187 = vmatmul.bf16.gmra.mxu0 %v177
    %v188 = vpop.f32.mrf.mxu0
    %v189 = vadd.f32 %v162, %v188
    %v190 = vpop.f32.mrf.mxu0
    %191 = vdwg.mxu0
    %192 = vmax.xlane.f32.xlu0 %v189
    %v193 = vpop.xlane.xlu0 %192
    %v194 = vsub.f32 %v189, %v193
    %v195 = vmul.f32 %v194, 1.442695
    %v196 = vpow.pop %v195
    %197 = vadd.xlane.f32.xlu0 %v196
    %v198 = vpop.xlane.xlu0 %197
    %v199 = vrcp.pop %v198
    %v200 = vmul.f32 %v198, %v199
    %v201 = vsub.f32 1.0, %v200
    %v202 = vmul.f32 %v199, %v201
    %v203 = vadd.f32 %v199, %v202
    %vm204 = vweird.f32 %v198
    %vm205 = vweird.f32 %v199
    %vm206 = vmor %vm204, %vm205
    %v207 = vsel %vm206, %v199, %v203
    %v208 = vand.u32 2147483647, %v198
    %vm209 = vcmp.eq.f32.partialorder %v208, 8.507059e+37
    %v210 = vand.u32 %v198, 2147483648
    %v211 = vor.u32 1.1754944e-38, %v210
    %v212 = vsel %vm209, %v211, %v207
    %v213 = vmul.f32 %v196, %v212
    %214 = vst [vmem:[#allocation10] sm:$0xff] %v213
    // Predicated region
    $region46: #{tpu_custom_call.1} parent=1 // pred_check
      _
    $region47: #{tpu_custom_call.1} parent=1 // pred_check_branch
      %216 = sbr.rel (0) target = $region49
    $region48: #{tpu_custom_call.1} parent=1 // pred_region
      %218 = vsyncadd [#allocation4], 0
      %s220 = sshll.u32 [#allocation10], 4
      %s221 = int_to_ptr.vmem [resolvable:$true] %s220
      %s222 = sshll.u32 %s7, 4
      %s223 = int_to_ptr.hbm [resolvable:$true] %s222
      %225 = dma.vmem_to_hbm [thread:$0]  %s221, 128, %s223, [#allocation4]
    $region49: #{tpu_custom_call.1} parent=1 // pred_fallthru
      _
    // Predicated region
    $region50: #{tpu_custom_call.1} parent=1 // pred_check
      _
    $region51: #{tpu_custom_call.1} parent=1 // pred_check_branch
      %227 = sbr.rel (0) target = $region53
    $region52: #{tpu_custom_call.1} parent=1 // pred_region
      %229 = dma.done [#allocation4], 128
    $region53: #{tpu_custom_call.1} parent=1 // pred_fallthru
      _
    %230 = vsyncpa [#allocation3], 1
    %231 = vsyncpa [#allocation6], 1
    %232 = vsyncpa [#allocation9], 1
    %233 = vsyncpa [#allocation4], 1

</llo_original>
